<compile_context>
chip_gen: v5e
topology: v5e:2x2
jax: 0.10.0
libtpu: 0.0.40
codegen_flags: <defaults>
</compile_context>

<pallas_src>
import jax
import jax.numpy as jnp
import numpy as np
from jax.experimental import pallas as pl
from jax.experimental.pallas import tpu as pltpu

# ---------------- model hyper-parameters (small, synthetic) ----------------
B = 2            # batch
S = 8            # seq len (value_len == key_len == query_len)
E = 32           # embed_size
HEADS = 4        # heads
D = E // HEADS   # head_dim
FWD = 4          # forward_expansion
HID = FWD * E    # hidden dim of the MLP
EPS = 1e-5       # nn.LayerNorm default eps


# ------------------------------- kernel ------------------------------------
def transformer_block_kernel(
    qh_ref, kh_ref, vh_ref,    # (B*H, S, D) head-split q/k/v
    bias_ref,                  # (B*H, S, S) additive mask bias (f32, precomputed)
    q_ref,                     # (B*S, E) original query (residual path)
    wfc_ref, bfc_ref,          # fc_out : (E, E) pre-transposed (in,out), bias (1, E)
    g1_ref, be1_ref,           # norm1  : (1, E), (1, E)
    w1_ref, b1_ref,            # ff lin1: (E, HID) pre-transposed, bias (1, HID)
    w2_ref, b2_ref,            # ff lin2: (HID, E) pre-transposed, bias (1, E)
    g2_ref, be2_ref,           # norm2  : (1, E), (1, E)
    out_ref,                   # (B*S, E)
    merged_ref,                # VMEM scratch (B*S, E) f32 — head-merge staging
):
    f32 = jnp.float32
    inv_scale = f32(1.0 / (E ** 0.5))

    qh = qh_ref[...] * inv_scale          # (BH, S, D), 1/sqrt(E) folded into q
    kh = kh_ref[...]
    vh = vh_ref[...]

    # ---- attention: one batched QK^T over all (batch, head) pairs ----
    energy = jnp.einsum("bqd,bkd->bqk", qh, kh,
                        preferred_element_type=f32)        # (BH, S, S)
    energy = energy + bias_ref[...]                        # additive mask bias

    # numerically-stable softmax over the key axis (approx reciprocal -> EUP slot)
    energy = energy - jnp.max(energy, axis=-1, keepdims=True)
    p = jnp.exp(energy)
    p = p * pl.reciprocal(jnp.sum(p, axis=-1, keepdims=True), approx=True)

    # batched P @ V -> per-(batch, head) attention output
    att = jnp.einsum("bqk,bkd->bqd", p, vh,
                     preferred_element_type=f32)           # (BH, S, D)

    # ---- head merge into one (B*S, E) slab via static lane-slice stores ----
    for b in range(B):
        for h in range(HEADS):
            merged_ref[b * S:(b + 1) * S, h * D:(h + 1) * D] = att[b * HEADS + h]
    merged = merged_ref[...]                               # (BS, E)

    # ---- fc_out: single (B*S, E) @ (E, E) MXU matmul ----
    fc = jnp.dot(merged, wfc_ref[...], preferred_element_type=f32) + bfc_ref[...]

    # ---- x = norm1(attention + query) ----
    x = fc + q_ref[...]
    mu = jnp.mean(x, axis=-1, keepdims=True)
    var = jnp.mean((x - mu) * (x - mu), axis=-1, keepdims=True)
    x = (x - mu) * jax.lax.rsqrt(var + EPS)
    x = x * g1_ref[...] + be1_ref[...]

    # ---- feed forward: Linear -> GELU(exact erf) -> Linear ----
    h1 = jnp.dot(x, w1_ref[...], preferred_element_type=f32) + b1_ref[...]
    h1 = 0.5 * h1 * (1.0 + jax.lax.erf(h1 * f32(0.7071067811865476)))
    ff = jnp.dot(h1, w2_ref[...], preferred_element_type=f32) + b2_ref[...]

    # ---- out = norm2(ff + x) ----
    y = ff + x
    mu2 = jnp.mean(y, axis=-1, keepdims=True)
    var2 = jnp.mean((y - mu2) * (y - mu2), axis=-1, keepdims=True)
    y = (y - mu2) * jax.lax.rsqrt(var2 + EPS)
    out_ref[...] = (y * g2_ref[...] + be2_ref[...]).astype(out_ref.dtype)


# --------------------------- one-time parameter prep -------------------------
def prepare_params(params):
    """Hoisted layout plumbing: done once at init, never in the per-call path."""
    return {
        "wfc_t": params["wfc"].T,              # (E_in, E_out)
        "bfc": params["bfc"].reshape(1, E),
        "g1": params["g1"].reshape(1, E),
        "be1": params["be1"].reshape(1, E),
        "w1_t": params["w1"].T,                # (E, HID)
        "b1": params["b1"].reshape(1, HID),
        "w2_t": params["w2"].T,                # (HID, E)
        "b2": params["b2"].reshape(1, E),
        "g2": params["g2"].reshape(1, E),
        "be2": params["be2"].reshape(1, E),
    }


# ------------------------------- jitted wrapper -------------------------------
@jax.jit
def transformer_block(value, key, query, mask, prepped):
    """value/key/query: (B, S, E) f32; mask: (B, 1, S, S) i32; prepped from prepare_params."""
    n, s, e = query.shape
    h, d = HEADS, D

    # input layout plumbing (tiny, fused under this jit with the pallas_call)
    def to_heads(x):
        return x.reshape(n, s, h, d).transpose(0, 2, 1, 3).reshape(n * h, s, d)

    qh, kh, vh = to_heads(query), to_heads(key), to_heads(value)
    q_flat = query.reshape(n * s, e)

    # additive mask bias, pre-broadcast over heads and flattened to (B*H, S, S)
    bias = jnp.where(mask == 0, jnp.float32(-1e20), jnp.float32(0.0))
    bias = jnp.broadcast_to(bias, (n, h, s, s)).reshape(n * h, s, s).astype(jnp.float32)

    vmem = pl.BlockSpec(memory_space=pltpu.MemorySpace.VMEM)

    # Single invocation, no grid: every operand is whole-array resident in VMEM
    # (total working set is a few tens of KB — far under the scoped VMEM limit on any chip).
    out = pl.pallas_call(
        transformer_block_kernel,
        out_shape=jax.ShapeDtypeStruct((n * s, e), query.dtype),
        in_specs=[vmem] * 15,
        out_specs=vmem,
        scratch_shapes=[pltpu.VMEM((n * s, e), jnp.float32)],
    )(qh, kh, vh, bias, q_flat,
      prepped["wfc_t"], prepped["bfc"], prepped["g1"], prepped["be1"],
      prepped["w1_t"], prepped["b1"], prepped["w2_t"], prepped["b2"],
      prepped["g2"], prepped["be2"])

    return out.reshape(n, s, e)


# --------------------------- pure-JAX reference ------------------------------
def transformer_block_ref(value, key, query, mask, params):
    n, s, e = query.shape
    q = query.reshape(n, s, HEADS, D)
    k = key.reshape(n, s, HEADS, D)
    v = value.reshape(n, s, HEADS, D)
    energy = jnp.einsum("nqhd,nkhd->nhqk", q, k)
    energy = jnp.where(mask == 0, -1e20, energy)
    attn = jax.nn.softmax(energy / (e ** 0.5), axis=3)
    out = jnp.einsum("nhql,nlhd->nqhd", attn, v).reshape(n, s, e)
    attention = out @ params["wfc"].T + params["bfc"]

    def layernorm(x, g, b):
        mu = jnp.mean(x, axis=-1, keepdims=True)
        var = jnp.mean((x - mu) ** 2, axis=-1, keepdims=True)
        return (x - mu) / jnp.sqrt(var + EPS) * g + b

    x = layernorm(attention + query, params["g1"], params["be1"])
    h1 = x @ params["w1"].T + params["b1"]
    h1 = jax.nn.gelu(h1, approximate=False)
    ff = h1 @ params["w2"].T + params["b2"]
    return layernorm(ff + x, params["g2"], params["be2"])


# ----------------------------------- main ------------------------------------
if __name__ == "__main__":
    root = jax.random.PRNGKey(0)
    keys = jax.random.split(root, 16)

    value = jax.random.normal(keys[0], (B, S, E), dtype=jnp.float32)
    key_in = jax.random.normal(keys[1], (B, S, E), dtype=jnp.float32)
    query = jax.random.normal(keys[2], (B, S, E), dtype=jnp.float32)
    # causal-style mask, broadcast over heads: (B, 1, S, S)
    mask = jnp.broadcast_to(
        jnp.tril(jnp.ones((S, S), dtype=jnp.int32))[None, None], (B, 1, S, S)
    )

    params = {
        "wfc": 0.05 * jax.random.normal(keys[3], (E, E), jnp.float32),
        "bfc": 0.01 * jax.random.normal(keys[4], (E,), jnp.float32),
        "g1": 1.0 + 0.1 * jax.random.normal(keys[5], (E,), jnp.float32),
        "be1": 0.1 * jax.random.normal(keys[6], (E,), jnp.float32),
        "w1": 0.05 * jax.random.normal(keys[7], (HID, E), jnp.float32),
        "b1": 0.01 * jax.random.normal(keys[8], (HID,), jnp.float32),
        "w2": 0.05 * jax.random.normal(keys[9], (E, HID), jnp.float32),
        "b2": 0.01 * jax.random.normal(keys[10], (E,), jnp.float32),
        "g2": 1.0 + 0.1 * jax.random.normal(keys[11], (E,), jnp.float32),
        "be2": 0.1 * jax.random.normal(keys[12], (E,), jnp.float32),
    }

    prepped = jax.tree_util.tree_map(jax.block_until_ready, prepare_params(params))

    out = transformer_block(value, key_in, query, mask, prepped)
    out = jax.block_until_ready(out)

    ref = jax.block_until_ready(transformer_block_ref(value, key_in, query, mask, params))
    np.testing.assert_allclose(np.asarray(out), np.asarray(ref), rtol=1e-2, atol=1e-2)

    print("KERNEL_OK")
</pallas_src>

<mosaic_0001>
module attributes {stable_mosaic.version = 11 : i64} {
  func.func @transformer_block_kernel(%arg0: memref<8x8x8xf32, #tpu.memory_space<vmem>>, %arg1: memref<8x8x8xf32, #tpu.memory_space<vmem>>, %arg2: memref<8x8x8xf32, #tpu.memory_space<vmem>>, %arg3: memref<8x8x8xf32, #tpu.memory_space<vmem>>, %arg4: memref<16x32xf32, #tpu.memory_space<vmem>>, %arg5: memref<32x32xf32, #tpu.memory_space<vmem>>, %arg6: memref<1x32xf32, #tpu.memory_space<vmem>>, %arg7: memref<1x32xf32, #tpu.memory_space<vmem>>, %arg8: memref<1x32xf32, #tpu.memory_space<vmem>>, %arg9: memref<32x128xf32, #tpu.memory_space<vmem>>, %arg10: memref<1x128xf32, #tpu.memory_space<vmem>>, %arg11: memref<128x32xf32, #tpu.memory_space<vmem>>, %arg12: memref<1x32xf32, #tpu.memory_space<vmem>>, %arg13: memref<1x32xf32, #tpu.memory_space<vmem>>, %arg14: memref<1x32xf32, #tpu.memory_space<vmem>>, %arg15: memref<16x32xf32, #tpu.memory_space<vmem>>, %arg16: memref<16x32xf32, #tpu.memory_space<vmem>>) attributes {dimension_semantics = [], scalar_prefetch = 0 : i64, scratch_operands = 1 : i64, tpu.core_type = #tpu.core_type<tc>} {
    %c0 = arith.constant 0 : index
    %c0_0 = arith.constant 0 : index
    %c0_1 = arith.constant 0 : index
    %0 = vector.load %arg0[%c0, %c0_0, %c0_1] : memref<8x8x8xf32, #tpu.memory_space<vmem>>, vector<8x8x8xf32>
    %cst = arith.constant 0.176776692 : f32
    %1 = vector.broadcast %cst : f32 to vector<8x8x8xf32>
    %2 = arith.mulf %0, %1 : vector<8x8x8xf32>
    %c0_2 = arith.constant 0 : index
    %c0_3 = arith.constant 0 : index
    %c0_4 = arith.constant 0 : index
    %3 = vector.load %arg1[%c0_2, %c0_3, %c0_4] : memref<8x8x8xf32, #tpu.memory_space<vmem>>, vector<8x8x8xf32>
    %c0_5 = arith.constant 0 : index
    %c0_6 = arith.constant 0 : index
    %c0_7 = arith.constant 0 : index
    %4 = vector.load %arg2[%c0_5, %c0_6, %c0_7] : memref<8x8x8xf32, #tpu.memory_space<vmem>>, vector<8x8x8xf32>
    "tpu.trace_start"() <{level = 10 : i32, message = "bqd,bkd->bqk"}> : () -> ()
    %cst_8 = arith.constant dense<0.000000e+00> : vector<8x8x8xf32>
    %5 = tpu.matmul %2, %3, %cst_8 {dimension_numbers = #tpu.dot_dimension_numbers<[2], [2], [1], [1], [0, 0, 0, 1, 1, 1], [0], [0]>} : vector<8x8x8xf32>, vector<8x8x8xf32>, vector<8x8x8xf32> -> vector<8x8x8xf32>
    "tpu.trace_stop"() : () -> ()
    %c0_9 = arith.constant 0 : index
    %c0_10 = arith.constant 0 : index
    %c0_11 = arith.constant 0 : index
    %6 = vector.load %arg3[%c0_9, %c0_10, %c0_11] : memref<8x8x8xf32, #tpu.memory_space<vmem>>, vector<8x8x8xf32>
    %7 = arith.addf %5, %6 : vector<8x8x8xf32>
    %cst_12 = arith.constant dense<0xFF800000> : vector<8x8xf32>
    %8 = vector.multi_reduction <maximumf>, %7, %cst_12 [2] : vector<8x8x8xf32> to vector<8x8xf32>
    %9 = vector.shape_cast %8 : vector<8x8xf32> to vector<8x8x1xf32>
    %10 = vector.broadcast %9 : vector<8x8x1xf32> to vector<8x8x8xf32>
    %11 = arith.subf %7, %10 : vector<8x8x8xf32>
    %12 = math.exp %11 : vector<8x8x8xf32>
    %cst_13 = arith.constant dense<0.000000e+00> : vector<8x8xf32>
    %13 = vector.multi_reduction <add>, %12, %cst_13 [2] : vector<8x8x8xf32> to vector<8x8xf32>
    %14 = vector.shape_cast %13 : vector<8x8xf32> to vector<8x8x1xf32>
    %15 = tpu.reciprocal %14 {approx = true} : vector<8x8x1xf32> -> vector<8x8x1xf32>
    %16 = vector.broadcast %15 : vector<8x8x1xf32> to vector<8x8x8xf32>
    %17 = arith.mulf %12, %16 : vector<8x8x8xf32>
    "tpu.trace_start"() <{level = 10 : i32, message = "bqk,bkd->bqd"}> : () -> ()
    %cst_14 = arith.constant dense<0.000000e+00> : vector<8x8x8xf32>
    %18 = tpu.matmul %17, %4, %cst_14 {dimension_numbers = #tpu.dot_dimension_numbers<[2], [1], [1], [2], [0, 0, 0, 1, 1, 2], [0], [0]>} : vector<8x8x8xf32>, vector<8x8x8xf32>, vector<8x8x8xf32> -> vector<8x8x8xf32>
    "tpu.trace_stop"() : () -> ()
    %19 = vector.extract_strided_slice %18 {offsets = [0, 0, 0], sizes = [1, 8, 8], strides = [1, 1, 1]} : vector<8x8x8xf32> to vector<1x8x8xf32>
    %20 = vector.shape_cast %19 : vector<1x8x8xf32> to vector<8x8xf32>
    %c0_15 = arith.constant 0 : index
    %c0_16 = arith.constant 0 : index
    %21 = vector.load %arg16[%c0_15, %c0_16] : memref<16x32xf32, #tpu.memory_space<vmem>>, vector<8x8xf32>
    tpu.vector_store %arg16[%c0_15, %c0_16], %20 {strides = array<i32>} : memref<16x32xf32, #tpu.memory_space<vmem>>, vector<8x8xf32>,
    %22 = vector.extract_strided_slice %18 {offsets = [1, 0, 0], sizes = [1, 8, 8], strides = [1, 1, 1]} : vector<8x8x8xf32> to vector<1x8x8xf32>
    %23 = vector.shape_cast %22 : vector<1x8x8xf32> to vector<8x8xf32>
    %c0_17 = arith.constant 0 : index
    %c8 = arith.constant 8 : index
    %24 = vector.load %arg16[%c0_17, %c8] : memref<16x32xf32, #tpu.memory_space<vmem>>, vector<8x8xf32>
    tpu.vector_store %arg16[%c0_17, %c8], %23 {strides = array<i32>} : memref<16x32xf32, #tpu.memory_space<vmem>>, vector<8x8xf32>,
    %25 = vector.extract_strided_slice %18 {offsets = [2, 0, 0], sizes = [1, 8, 8], strides = [1, 1, 1]} : vector<8x8x8xf32> to vector<1x8x8xf32>
    %26 = vector.shape_cast %25 : vector<1x8x8xf32> to vector<8x8xf32>
    %c0_18 = arith.constant 0 : index
    %c16 = arith.constant 16 : index
    %27 = vector.load %arg16[%c0_18, %c16] : memref<16x32xf32, #tpu.memory_space<vmem>>, vector<8x8xf32>
    tpu.vector_store %arg16[%c0_18, %c16], %26 {strides = array<i32>} : memref<16x32xf32, #tpu.memory_space<vmem>>, vector<8x8xf32>,
    %28 = vector.extract_strided_slice %18 {offsets = [3, 0, 0], sizes = [1, 8, 8], strides = [1, 1, 1]} : vector<8x8x8xf32> to vector<1x8x8xf32>
    %29 = vector.shape_cast %28 : vector<1x8x8xf32> to vector<8x8xf32>
    %c0_19 = arith.constant 0 : index
    %c24 = arith.constant 24 : index
    %30 = vector.load %arg16[%c0_19, %c24] : memref<16x32xf32, #tpu.memory_space<vmem>>, vector<8x8xf32>
    tpu.vector_store %arg16[%c0_19, %c24], %29 {strides = array<i32>} : memref<16x32xf32, #tpu.memory_space<vmem>>, vector<8x8xf32>,
    %31 = vector.extract_strided_slice %18 {offsets = [4, 0, 0], sizes = [1, 8, 8], strides = [1, 1, 1]} : vector<8x8x8xf32> to vector<1x8x8xf32>
    %32 = vector.shape_cast %31 : vector<1x8x8xf32> to vector<8x8xf32>
    %c8_20 = arith.constant 8 : index
    %c0_21 = arith.constant 0 : index
    %33 = vector.load %arg16[%c8_20, %c0_21] : memref<16x32xf32, #tpu.memory_space<vmem>>, vector<8x8xf32>
    tpu.vector_store %arg16[%c8_20, %c0_21], %32 {strides = array<i32>} : memref<16x32xf32, #tpu.memory_space<vmem>>, vector<8x8xf32>,
    %34 = vector.extract_strided_slice %18 {offsets = [5, 0, 0], sizes = [1, 8, 8], strides = [1, 1, 1]} : vector<8x8x8xf32> to vector<1x8x8xf32>
    %35 = vector.shape_cast %34 : vector<1x8x8xf32> to vector<8x8xf32>
    %c8_22 = arith.constant 8 : index
    %c8_23 = arith.constant 8 : index
    %36 = vector.load %arg16[%c8_22, %c8_23] : memref<16x32xf32, #tpu.memory_space<vmem>>, vector<8x8xf32>
    tpu.vector_store %arg16[%c8_22, %c8_23], %35 {strides = array<i32>} : memref<16x32xf32, #tpu.memory_space<vmem>>, vector<8x8xf32>,
    %37 = vector.extract_strided_slice %18 {offsets = [6, 0, 0], sizes = [1, 8, 8], strides = [1, 1, 1]} : vector<8x8x8xf32> to vector<1x8x8xf32>
    %38 = vector.shape_cast %37 : vector<1x8x8xf32> to vector<8x8xf32>
    %c8_24 = arith.constant 8 : index
    %c16_25 = arith.constant 16 : index
    %39 = vector.load %arg16[%c8_24, %c16_25] : memref<16x32xf32, #tpu.memory_space<vmem>>, vector<8x8xf32>
    tpu.vector_store %arg16[%c8_24, %c16_25], %38 {strides = array<i32>} : memref<16x32xf32, #tpu.memory_space<vmem>>, vector<8x8xf32>,
    %40 = vector.extract_strided_slice %18 {offsets = [7, 0, 0], sizes = [1, 8, 8], strides = [1, 1, 1]} : vector<8x8x8xf32> to vector<1x8x8xf32>
    %41 = vector.shape_cast %40 : vector<1x8x8xf32> to vector<8x8xf32>
    %c8_26 = arith.constant 8 : index
    %c24_27 = arith.constant 24 : index
    %42 = vector.load %arg16[%c8_26, %c24_27] : memref<16x32xf32, #tpu.memory_space<vmem>>, vector<8x8xf32>
    tpu.vector_store %arg16[%c8_26, %c24_27], %41 {strides = array<i32>} : memref<16x32xf32, #tpu.memory_space<vmem>>, vector<8x8xf32>,
    %c0_28 = arith.constant 0 : index
    %c0_29 = arith.constant 0 : index
    %43 = vector.load %arg16[%c0_28, %c0_29] : memref<16x32xf32, #tpu.memory_space<vmem>>, vector<16x32xf32>
    %c0_30 = arith.constant 0 : index
    %c0_31 = arith.constant 0 : index
    %44 = vector.load %arg5[%c0_30, %c0_31] : memref<32x32xf32, #tpu.memory_space<vmem>>, vector<32x32xf32>
    %cst_32 = arith.constant dense<0.000000e+00> : vector<16x32xf32>
    %45 = tpu.matmul %43, %44, %cst_32 {dimension_numbers = #tpu.dot_dimension_numbers<[1], [0], [0], [1], [0, 0, 1, 1], [], []>} : vector<16x32xf32>, vector<32x32xf32>, vector<16x32xf32> -> vector<16x32xf32>
    %c0_33 = arith.constant 0 : index
    %c0_34 = arith.constant 0 : index
    %46 = vector.load %arg6[%c0_33, %c0_34] : memref<1x32xf32, #tpu.memory_space<vmem>>, vector<1x32xf32>
    %47 = vector.broadcast %46 : vector<1x32xf32> to vector<16x32xf32>
    %48 = arith.addf %45, %47 : vector<16x32xf32>
    %c0_35 = arith.constant 0 : index
    %c0_36 = arith.constant 0 : index
    %49 = vector.load %arg4[%c0_35, %c0_36] : memref<16x32xf32, #tpu.memory_space<vmem>>, vector<16x32xf32>
    %50 = arith.addf %48, %49 : vector<16x32xf32>
    %cst_37 = arith.constant dense<0.000000e+00> : vector<16xf32>
    %51 = vector.multi_reduction <add>, %50, %cst_37 [1] : vector<16x32xf32> to vector<16xf32>
    %52 = vector.shape_cast %51 : vector<16xf32> to vector<16x1xf32>
    %cst_38 = arith.constant 3.200000e+01 : f32
    %53 = vector.broadcast %cst_38 : f32 to vector<16x1xf32>
    %54 = arith.divf %52, %53 : vector<16x1xf32>
    %55 = vector.broadcast %54 : vector<16x1xf32> to vector<16x32xf32>
    %56 = arith.subf %50, %55 : vector<16x32xf32>
    %57 = vector.broadcast %54 : vector<16x1xf32> to vector<16x32xf32>
    %58 = arith.subf %50, %57 : vector<16x32xf32>
    %59 = arith.mulf %56, %58 : vector<16x32xf32>
    %cst_39 = arith.constant dense<0.000000e+00> : vector<16xf32>
    %60 = vector.multi_reduction <add>, %59, %cst_39 [1] : vector<16x32xf32> to vector<16xf32>
    %61 = vector.shape_cast %60 : vector<16xf32> to vector<16x1xf32>
    %cst_40 = arith.constant 3.200000e+01 : f32
    %62 = vector.broadcast %cst_40 : f32 to vector<16x1xf32>
    %63 = arith.divf %61, %62 : vector<16x1xf32>
    %64 = vector.broadcast %54 : vector<16x1xf32> to vector<16x32xf32>
    %65 = arith.subf %50, %64 : vector<16x32xf32>
    %cst_41 = arith.constant 9.99999974E-6 : f32
    %66 = vector.broadcast %cst_41 : f32 to vector<16x1xf32>
    %67 = arith.addf %63, %66 : vector<16x1xf32>
    %68 = math.rsqrt %67 : vector<16x1xf32>
    %69 = vector.broadcast %68 : vector<16x1xf32> to vector<16x32xf32>
    %70 = arith.mulf %65, %69 : vector<16x32xf32>
    %c0_42 = arith.constant 0 : index
    %c0_43 = arith.constant 0 : index
    %71 = vector.load %arg7[%c0_42, %c0_43] : memref<1x32xf32, #tpu.memory_space<vmem>>, vector<1x32xf32>
    %72 = vector.broadcast %71 : vector<1x32xf32> to vector<16x32xf32>
    %73 = arith.mulf %70, %72 : vector<16x32xf32>
    %c0_44 = arith.constant 0 : index
    %c0_45 = arith.constant 0 : index
    %74 = vector.load %arg8[%c0_44, %c0_45] : memref<1x32xf32, #tpu.memory_space<vmem>>, vector<1x32xf32>
    %75 = vector.broadcast %74 : vector<1x32xf32> to vector<16x32xf32>
    %76 = arith.addf %73, %75 : vector<16x32xf32>
    %c0_46 = arith.constant 0 : index
    %c0_47 = arith.constant 0 : index
    %77 = vector.load %arg9[%c0_46, %c0_47] : memref<32x128xf32, #tpu.memory_space<vmem>>, vector<32x128xf32>
    %cst_48 = arith.constant dense<0.000000e+00> : vector<16x128xf32>
    %78 = tpu.matmul %76, %77, %cst_48 {dimension_numbers = #tpu.dot_dimension_numbers<[1], [0], [0], [1], [0, 0, 1, 1], [], []>} : vector<16x32xf32>, vector<32x128xf32>, vector<16x128xf32> -> vector<16x128xf32>
    %c0_49 = arith.constant 0 : index
    %c0_50 = arith.constant 0 : index
    %79 = vector.load %arg10[%c0_49, %c0_50] : memref<1x128xf32, #tpu.memory_space<vmem>>, vector<1x128xf32>
    %80 = vector.broadcast %79 : vector<1x128xf32> to vector<16x128xf32>
    %81 = arith.addf %78, %80 : vector<16x128xf32>
    %cst_51 = arith.constant 5.000000e-01 : f32
    %82 = vector.broadcast %cst_51 : f32 to vector<16x128xf32>
    %83 = arith.mulf %82, %81 : vector<16x128xf32>
    %cst_52 = arith.constant 0.707106769 : f32
    %84 = vector.broadcast %cst_52 : f32 to vector<16x128xf32>
    %85 = arith.mulf %81, %84 : vector<16x128xf32>
    %86 = math.erf %85 : vector<16x128xf32>
    %cst_53 = arith.constant 1.000000e+00 : f32
    %87 = vector.broadcast %cst_53 : f32 to vector<16x128xf32>
    %88 = arith.addf %87, %86 : vector<16x128xf32>
    %89 = arith.mulf %83, %88 : vector<16x128xf32>
    %c0_54 = arith.constant 0 : index
    %c0_55 = arith.constant 0 : index
    %90 = vector.load %arg11[%c0_54, %c0_55] : memref<128x32xf32, #tpu.memory_space<vmem>>, vector<128x32xf32>
    %cst_56 = arith.constant dense<0.000000e+00> : vector<16x32xf32>
    %91 = tpu.matmul %89, %90, %cst_56 {dimension_numbers = #tpu.dot_dimension_numbers<[1], [0], [0], [1], [0, 0, 1, 1], [], []>} : vector<16x128xf32>, vector<128x32xf32>, vector<16x32xf32> -> vector<16x32xf32>
    %c0_57 = arith.constant 0 : index
    %c0_58 = arith.constant 0 : index
    %92 = vector.load %arg12[%c0_57, %c0_58] : memref<1x32xf32, #tpu.memory_space<vmem>>, vector<1x32xf32>
    %93 = vector.broadcast %92 : vector<1x32xf32> to vector<16x32xf32>
    %94 = arith.addf %91, %93 : vector<16x32xf32>
    %95 = arith.addf %94, %76 : vector<16x32xf32>
    %cst_59 = arith.constant dense<0.000000e+00> : vector<16xf32>
    %96 = vector.multi_reduction <add>, %95, %cst_59 [1] : vector<16x32xf32> to vector<16xf32>
    %97 = vector.shape_cast %96 : vector<16xf32> to vector<16x1xf32>
    %cst_60 = arith.constant 3.200000e+01 : f32
    %98 = vector.broadcast %cst_60 : f32 to vector<16x1xf32>
    %99 = arith.divf %97, %98 : vector<16x1xf32>
    %100 = vector.broadcast %99 : vector<16x1xf32> to vector<16x32xf32>
    %101 = arith.subf %95, %100 : vector<16x32xf32>
    %102 = vector.broadcast %99 : vector<16x1xf32> to vector<16x32xf32>
    %103 = arith.subf %95, %102 : vector<16x32xf32>
    %104 = arith.mulf %101, %103 : vector<16x32xf32>
    %cst_61 = arith.constant dense<0.000000e+00> : vector<16xf32>
    %105 = vector.multi_reduction <add>, %104, %cst_61 [1] : vector<16x32xf32> to vector<16xf32>
    %106 = vector.shape_cast %105 : vector<16xf32> to vector<16x1xf32>
    %cst_62 = arith.constant 3.200000e+01 : f32
    %107 = vector.broadcast %cst_62 : f32 to vector<16x1xf32>
    %108 = arith.divf %106, %107 : vector<16x1xf32>
    %109 = vector.broadcast %99 : vector<16x1xf32> to vector<16x32xf32>
    %110 = arith.subf %95, %109 : vector<16x32xf32>
    %cst_63 = arith.constant 9.99999974E-6 : f32
    %111 = vector.broadcast %cst_63 : f32 to vector<16x1xf32>
    %112 = arith.addf %108, %111 : vector<16x1xf32>
    %113 = math.rsqrt %112 : vector<16x1xf32>
    %114 = vector.broadcast %113 : vector<16x1xf32> to vector<16x32xf32>
    %115 = arith.mulf %110, %114 : vector<16x32xf32>
    %c0_64 = arith.constant 0 : index
    %c0_65 = arith.constant 0 : index
    %116 = vector.load %arg13[%c0_64, %c0_65] : memref<1x32xf32, #tpu.memory_space<vmem>>, vector<1x32xf32>
    %117 = vector.broadcast %116 : vector<1x32xf32> to vector<16x32xf32>
    %118 = arith.mulf %115, %117 : vector<16x32xf32>
    %c0_66 = arith.constant 0 : index
    %c0_67 = arith.constant 0 : index
    %119 = vector.load %arg14[%c0_66, %c0_67] : memref<1x32xf32, #tpu.memory_space<vmem>>, vector<1x32xf32>
    %120 = vector.broadcast %119 : vector<1x32xf32> to vector<16x32xf32>
    %121 = arith.addf %118, %120 : vector<16x32xf32>
    %c0_68 = arith.constant 0 : index
    %c0_69 = arith.constant 0 : index
    %122 = vector.load %arg15[%c0_68, %c0_69] : memref<16x32xf32, #tpu.memory_space<vmem>>, vector<16x32xf32>
    tpu.vector_store %arg15[%c0_68, %c0_69], %121 {strides = array<i32>} : memref<16x32xf32, #tpu.memory_space<vmem>>, vector<16x32xf32>,
    return
  }
}

</mosaic_0001>

<llo_original>
// kernel: transformer_block.1
$region0: #{transformer_block.1}
  #allocation0 [shape = 'u32[]', space=smem, size = 0x4, offset = 0x4, fixed_abs, tag = 'smem constant byte address 0x4 - core index']
  #allocation1 [shape = 'u32[72,128]{1,0:T(1,128)}', space=vmem, size = 0x9000, scoped, tag = 'internal scratch']
  #allocation2 [shape = 'f32[16,32]{1,0:T(8,128)}', space=vmem, size = 0x2000, scoped, tag = 'scratch operand']
  %s0 = inlined_call_operand.vmem [shape: f32[8,8,8], index: 0, kind: input, shape index: {}]
  %s1 = inlined_call_operand.vmem [shape: f32[8,8,8], index: 1, kind: input, shape index: {}]
  %s2 = inlined_call_operand.vmem [shape: f32[8,8,8], index: 2, kind: input, shape index: {}]
  %s3 = inlined_call_operand.vmem [shape: f32[8,8,8], index: 3, kind: input, shape index: {}]
  %s4 = inlined_call_operand.vmem [shape: f32[16,32], index: 4, kind: input, shape index: {}]
  %s5 = inlined_call_operand.vmem [shape: f32[32,32], index: 5, kind: input, shape index: {}]
  %s6 = inlined_call_operand.vmem [shape: f32[1,32], index: 6, kind: input, shape index: {}]
  %s7 = inlined_call_operand.vmem [shape: f32[1,32], index: 7, kind: input, shape index: {}]
  %s8 = inlined_call_operand.vmem [shape: f32[1,32], index: 8, kind: input, shape index: {}]
  %s9 = inlined_call_operand.vmem [shape: f32[32,128], index: 9, kind: input, shape index: {}]
  %s10 = inlined_call_operand.vmem [shape: f32[1,128], index: 10, kind: input, shape index: {}]
  %s11 = inlined_call_operand.vmem [shape: f32[128,32], index: 11, kind: input, shape index: {}]
  %s12 = inlined_call_operand.vmem [shape: f32[1,32], index: 12, kind: input, shape index: {}]
  %s13 = inlined_call_operand.vmem [shape: f32[1,32], index: 13, kind: input, shape index: {}]
  %s14 = inlined_call_operand.vmem [shape: f32[1,32], index: 14, kind: input, shape index: {}]
  %s15 = inlined_call_operand.hbm [shape: f32[16,32], index: 15, kind: output, shape index: {}]
  %s16 = sld [smem:[#allocation0]]
  $region70: #{transformer_block.1} parent=0
    _
  %s18 = ssub.s32 1, %s16
  %s19 = scalar_select 0, %s18, %s16
  $region1: #{transformer_block.1} parent=0
    #allocation3 [shape = 'u8[8192]{0}', space=vmem, size = 0x2000, scoped, tag = 'output window, operand 0, single buffered']
    #allocation4 [shape = 's32[1]{0}', space=sflag, size = 0x4, scoped, tag = 'scoped memory for transformer_block.1']
    %20 = vsyncpa [#allocation4], 0
    // Predicated region
    $region2: #{transformer_block.1} parent=1 // pred_check
      _
    $region3: #{transformer_block.1} parent=1 // pred_check_branch
      %22 = sbr.rel (0) target = $region5
    $region4: #{transformer_block.1} parent=1 // pred_region
      _
    $region5: #{transformer_block.1} parent=1 // pred_fallthru
      _
    // Predicated region
    $region6: #{transformer_block.1} parent=1 // pred_check
      _
    $region7: #{transformer_block.1} parent=1 // pred_check_branch
      %24 = sbr.rel (0) target = $region9
    $region8: #{transformer_block.1} parent=1 // pred_region
      _
    $region9: #{transformer_block.1} parent=1 // pred_fallthru
      _
    // Predicated region
    $region10: #{transformer_block.1} parent=1 // pred_check
      _
    $region11: #{transformer_block.1} parent=1 // pred_check_branch
      %26 = sbr.rel (0) target = $region13
    $region12: #{transformer_block.1} parent=1 // pred_region
      _
    $region13: #{transformer_block.1} parent=1 // pred_fallthru
      _
    // Predicated region
    $region14: #{transformer_block.1} parent=1 // pred_check
      _
    $region15: #{transformer_block.1} parent=1 // pred_check_branch
      %28 = sbr.rel (0) target = $region17
    $region16: #{transformer_block.1} parent=1 // pred_region
      _
    $region17: #{transformer_block.1} parent=1 // pred_fallthru
      _
    // Predicated region
    $region18: #{transformer_block.1} parent=1 // pred_check
      _
    $region19: #{transformer_block.1} parent=1 // pred_check_branch
      %30 = sbr.rel (0) target = $region21
    $region20: #{transformer_block.1} parent=1 // pred_region
      _
    $region21: #{transformer_block.1} parent=1 // pred_fallthru
      _
    // Predicated region
    $region22: #{transformer_block.1} parent=1 // pred_check
      _
    $region23: #{transformer_block.1} parent=1 // pred_check_branch
      %32 = sbr.rel (0) target = $region25
    $region24: #{transformer_block.1} parent=1 // pred_region
      _
    $region25: #{transformer_block.1} parent=1 // pred_fallthru
      _
    // Predicated region
    $region26: #{transformer_block.1} parent=1 // pred_check
      _
    $region27: #{transformer_block.1} parent=1 // pred_check_branch
      %34 = sbr.rel (0) target = $region29
    $region28: #{transformer_block.1} parent=1 // pred_region
      _
    $region29: #{transformer_block.1} parent=1 // pred_fallthru
      _
    // Predicated region
    $region30: #{transformer_block.1} parent=1 // pred_check
      _
    $region31: #{transformer_block.1} parent=1 // pred_check_branch
      %36 = sbr.rel (0) target = $region33
    $region32: #{transformer_block.1} parent=1 // pred_region
      _
    $region33: #{transformer_block.1} parent=1 // pred_fallthru
      _
    // Predicated region
    $region34: #{transformer_block.1} parent=1 // pred_check
      _
    $region35: #{transformer_block.1} parent=1 // pred_check_branch
      %38 = sbr.rel (0) target = $region37
    $region36: #{transformer_block.1} parent=1 // pred_region
      _
    $region37: #{transformer_block.1} parent=1 // pred_fallthru
      _
    // Predicated region
    $region38: #{transformer_block.1} parent=1 // pred_check
      _
    $region39: #{transformer_block.1} parent=1 // pred_check_branch
      %40 = sbr.rel (0) target = $region41
    $region40: #{transformer_block.1} parent=1 // pred_region
      _
    $region41: #{transformer_block.1} parent=1 // pred_fallthru
      _
    // Predicated region
    $region42: #{transformer_block.1} parent=1 // pred_check
      _
    $region43: #{transformer_block.1} parent=1 // pred_check_branch
      %42 = sbr.rel (0) target = $region45
    $region44: #{transformer_block.1} parent=1 // pred_region
      _
    $region45: #{transformer_block.1} parent=1 // pred_fallthru
      _
    // Predicated region
    $region46: #{transformer_block.1} parent=1 // pred_check
      _
    $region47: #{transformer_block.1} parent=1 // pred_check_branch
      %44 = sbr.rel (0) target = $region49
    $region48: #{transformer_block.1} parent=1 // pred_region
      _
    $region49: #{transformer_block.1} parent=1 // pred_fallthru
      _
    // Predicated region
    $region50: #{transformer_block.1} parent=1 // pred_check
      _
    $region51: #{transformer_block.1} parent=1 // pred_check_branch
      %46 = sbr.rel (0) target = $region53
    $region52: #{transformer_block.1} parent=1 // pred_region
      _
    $region53: #{transformer_block.1} parent=1 // pred_fallthru
      _
    // Predicated region
    $region54: #{transformer_block.1} parent=1 // pred_check
      _
    $region55: #{transformer_block.1} parent=1 // pred_check_branch
      %48 = sbr.rel (0) target = $region57
    $region56: #{transformer_block.1} parent=1 // pred_region
      _
    $region57: #{transformer_block.1} parent=1 // pred_fallthru
      _
    // Predicated region
    $region58: #{transformer_block.1} parent=1 // pred_check
      _
    $region59: #{transformer_block.1} parent=1 // pred_check_branch
      %50 = sbr.rel (0) target = $region61
    $region60: #{transformer_block.1} parent=1 // pred_region
      _
    $region61: #{transformer_block.1} parent=1 // pred_fallthru
      _
    %v51 = vld [vmem:[%s0] sm:$0xff]
    %v52 = vld [vmem:[%s0 + $0x8] sm:$0xff]
    %v53 = vld [vmem:[%s0 + $0x10] sm:$0xff]
    %v54 = vld [vmem:[%s0 + $0x18] sm:$0xff]
    %v55 = vld [vmem:[%s0 + $0x20] sm:$0xff]
    %v56 = vld [vmem:[%s0 + $0x28] sm:$0xff]
    %v57 = vld [vmem:[%s0 + $0x30] sm:$0xff]
    %v58 = vld [vmem:[%s0 + $0x38] sm:$0xff]
    %v59 = vmul.f32 %v51, 0.17677669
    %v60 = vmul.f32 %v52, 0.17677669
    %v61 = vmul.f32 %v53, 0.17677669
    %v62 = vmul.f32 %v54, 0.17677669
    %v63 = vmul.f32 %v55, 0.17677669
    %v64 = vmul.f32 %v56, 0.17677669
    %v65 = vmul.f32 %v57, 0.17677669
    %v66 = vmul.f32 %v58, 0.17677669
    %v67 = vld [vmem:[%s1] sm:$0xff]
    %v68 = vld [vmem:[%s1 + $0x8] sm:$0xff]
    %v69 = vld [vmem:[%s1 + $0x10] sm:$0xff]
    %v70 = vld [vmem:[%s1 + $0x18] sm:$0xff]
    %v71 = vld [vmem:[%s1 + $0x20] sm:$0xff]
    %v72 = vld [vmem:[%s1 + $0x28] sm:$0xff]
    %v73 = vld [vmem:[%s1 + $0x30] sm:$0xff]
    %v74 = vld [vmem:[%s1 + $0x38] sm:$0xff]
    %v75 = vld [vmem:[%s2] sm:$0xff]
    %v76 = vld [vmem:[%s2 + $0x8] sm:$0xff]
    %v77 = vld [vmem:[%s2 + $0x10] sm:$0xff]
    %v78 = vld [vmem:[%s2 + $0x18] sm:$0xff]
    %v79 = vld [vmem:[%s2 + $0x20] sm:$0xff]
    %v80 = vld [vmem:[%s2 + $0x28] sm:$0xff]
    %v81 = vld [vmem:[%s2 + $0x30] sm:$0xff]
    %v82 = vld [vmem:[%s2 + $0x38] sm:$0xff]
    %v83 = vld [vmem:[%s3] sm:$0xff]
    %v84 = vld [vmem:[%s3 + $0x8] sm:$0xff]
    %v85 = vld [vmem:[%s3 + $0x10] sm:$0xff]
    %v86 = vld [vmem:[%s3 + $0x18] sm:$0xff]
    %v87 = vld [vmem:[%s3 + $0x20] sm:$0xff]
    %v88 = vld [vmem:[%s3 + $0x28] sm:$0xff]
    %v89 = vld [vmem:[%s3 + $0x30] sm:$0xff]
    %v90 = vld [vmem:[%s3 + $0x38] sm:$0xff]
    %vm91 = vcmask 64512
    %v93 = vsel %vm91, %v59, 0
    %v96 = vsel %vm91, %v67, 0
    %98 = vmatpush.xpose.msra.mxu0 0.0
    %99 = vmatpush.xpose.msra.mxu0 0.0
    %100 = vmatpush.xpose.msra.mxu0 0.0
    %101 = vmatpush.xpose.msra.mxu0 0.0
    %102 = vmatpush.xpose.msra.mxu0 0.0
    %103 = vmatpush.xpose.msra.mxu0 0.0
    %104 = vmatpush.xpose.msra.mxu0 0.0
    %105 = vmatpush.xpose.msra.mxu0 0.0
    %106 = vmatpush.xpose.msra.mxu0 0.0
    %107 = vmatpush.xpose.msra.mxu0 0.0
    %108 = vmatpush.xpose.msra.mxu0 0.0
    %109 = vmatpush.xpose.msra.mxu0 0.0
    %110 = vmatpush.xpose.msra.mxu0 0.0
    %111 = vmatpush.xpose.msra.mxu0 0.0
    %112 = vmatpush.xpose.msra.mxu0 0.0
    %113 = vmatpush.xpose.msra.mxu0 %v96
    %114 = vmatmul.f32.gmra.mxu0 %v93
    %v115 = vpop.f32.mrf.mxu0
    %v116 = vadd.f32 %v83, %v115
    %117 = vdwg.mxu0
    %v119 = vsel %vm91, %v60, 0
    %v122 = vsel %vm91, %v68, 0
    %124 = vmatpush.xpose.msra.mxu0 0.0
    %125 = vmatpush.xpose.msra.mxu0 0.0
    %126 = vmatpush.xpose.msra.mxu0 0.0
    %127 = vmatpush.xpose.msra.mxu0 0.0
    %128 = vmatpush.xpose.msra.mxu0 0.0
    %129 = vmatpush.xpose.msra.mxu0 0.0
    %130 = vmatpush.xpose.msra.mxu0 0.0
    %131 = vmatpush.xpose.msra.mxu0 0.0
    %132 = vmatpush.xpose.msra.mxu0 0.0
    %133 = vmatpush.xpose.msra.mxu0 0.0
    %134 = vmatpush.xpose.msra.mxu0 0.0
    %135 = vmatpush.xpose.msra.mxu0 0.0
    %136 = vmatpush.xpose.msra.mxu0 0.0
    %137 = vmatpush.xpose.msra.mxu0 0.0
    %138 = vmatpush.xpose.msra.mxu0 0.0
    %139 = vmatpush.xpose.msra.mxu0 %v122
    %140 = vmatmul.f32.gmra.mxu0 %v119
    %v141 = vpop.f32.mrf.mxu0
    %v142 = vadd.f32 %v84, %v141
    %143 = vdwg.mxu0
    %v145 = vsel %vm91, %v61, 0
    %v148 = vsel %vm91, %v69, 0
    %150 = vmatpush.xpose.msra.mxu0 0.0
    %151 = vmatpush.xpose.msra.mxu0 0.0
    %152 = vmatpush.xpose.msra.mxu0 0.0
    %153 = vmatpush.xpose.msra.mxu0 0.0
    %154 = vmatpush.xpose.msra.mxu0 0.0
    %155 = vmatpush.xpose.msra.mxu0 0.0
    %156 = vmatpush.xpose.msra.mxu0 0.0
    %157 = vmatpush.xpose.msra.mxu0 0.0
    %158 = vmatpush.xpose.msra.mxu0 0.0
    %159 = vmatpush.xpose.msra.mxu0 0.0
    %160 = vmatpush.xpose.msra.mxu0 0.0
    %161 = vmatpush.xpose.msra.mxu0 0.0
    %162 = vmatpush.xpose.msra.mxu0 0.0
    %163 = vmatpush.xpose.msra.mxu0 0.0
    %164 = vmatpush.xpose.msra.mxu0 0.0
    %165 = vmatpush.xpose.msra.mxu0 %v148
    %166 = vmatmul.f32.gmra.mxu0 %v145
    %v167 = vpop.f32.mrf.mxu0
    %v168 = vadd.f32 %v85, %v167
    %169 = vdwg.mxu0
    %v171 = vsel %vm91, %v62, 0
    %v174 = vsel %vm91, %v70, 0
    %176 = vmatpush.xpose.msra.mxu0 0.0
    %177 = vmatpush.xpose.msra.mxu0 0.0
    %178 = vmatpush.xpose.msra.mxu0 0.0
    %179 = vmatpush.xpose.msra.mxu0 0.0
    %180 = vmatpush.xpose.msra.mxu0 0.0
    %181 = vmatpush.xpose.msra.mxu0 0.0
    %182 = vmatpush.xpose.msra.mxu0 0.0
    %183 = vmatpush.xpose.msra.mxu0 0.0
    %184 = vmatpush.xpose.msra.mxu0 0.0
    %185 = vmatpush.xpose.msra.mxu0 0.0
    %186 = vmatpush.xpose.msra.mxu0 0.0
    %187 = vmatpush.xpose.msra.mxu0 0.0
    %188 = vmatpush.xpose.msra.mxu0 0.0
    %189 = vmatpush.xpose.msra.mxu0 0.0
    %190 = vmatpush.xpose.msra.mxu0 0.0
    %191 = vmatpush.xpose.msra.mxu0 %v174
    %192 = vmatmul.f32.gmra.mxu0 %v171
    %v193 = vpop.f32.mrf.mxu0
    %v194 = vadd.f32 %v86, %v193
    %195 = vdwg.mxu0
    %v197 = vsel %vm91, %v63, 0
    %v200 = vsel %vm91, %v71, 0
    %202 = vmatpush.xpose.msra.mxu0 0.0
    %203 = vmatpush.xpose.msra.mxu0 0.0
    %204 = vmatpush.xpose.msra.mxu0 0.0
    %205 = vmatpush.xpose.msra.mxu0 0.0
    %206 = vmatpush.xpose.msra.mxu0 0.0
    %207 = vmatpush.xpose.msra.mxu0 0.0
    %208 = vmatpush.xpose.msra.mxu0 0.0
    %209 = vmatpush.xpose.msra.mxu0 0.0
    %210 = vmatpush.xpose.msra.mxu0 0.0
    %211 = vmatpush.xpose.msra.mxu0 0.0
    %212 = vmatpush.xpose.msra.mxu0 0.0
    %213 = vmatpush.xpose.msra.mxu0 0.0
    %214 = vmatpush.xpose.msra.mxu0 0.0
    %215 = vmatpush.xpose.msra.mxu0 0.0
    %216 = vmatpush.xpose.msra.mxu0 0.0
    %217 = vmatpush.xpose.msra.mxu0 %v200
    %218 = vmatmul.f32.gmra.mxu0 %v197
    %v219 = vpop.f32.mrf.mxu0
    %v220 = vadd.f32 %v87, %v219
    %221 = vdwg.mxu0
    %v223 = vsel %vm91, %v64, 0
    %v226 = vsel %vm91, %v72, 0
    %228 = vmatpush.xpose.msra.mxu0 0.0
    %229 = vmatpush.xpose.msra.mxu0 0.0
    %230 = vmatpush.xpose.msra.mxu0 0.0
    %231 = vmatpush.xpose.msra.mxu0 0.0
    %232 = vmatpush.xpose.msra.mxu0 0.0
    %233 = vmatpush.xpose.msra.mxu0 0.0
    %234 = vmatpush.xpose.msra.mxu0 0.0
    %235 = vmatpush.xpose.msra.mxu0 0.0
    %236 = vmatpush.xpose.msra.mxu0 0.0
    %237 = vmatpush.xpose.msra.mxu0 0.0
    %238 = vmatpush.xpose.msra.mxu0 0.0
    %239 = vmatpush.xpose.msra.mxu0 0.0
    %240 = vmatpush.xpose.msra.mxu0 0.0
    %241 = vmatpush.xpose.msra.mxu0 0.0
    %242 = vmatpush.xpose.msra.mxu0 0.0
    %243 = vmatpush.xpose.msra.mxu0 %v226
    %244 = vmatmul.f32.gmra.mxu0 %v223
    %v245 = vpop.f32.mrf.mxu0
    %v246 = vadd.f32 %v88, %v245
    %247 = vdwg.mxu0
    %v249 = vsel %vm91, %v65, 0
    %v252 = vsel %vm91, %v73, 0
    %254 = vmatpush.xpose.msra.mxu0 0.0
    %255 = vmatpush.xpose.msra.mxu0 0.0
    %256 = vmatpush.xpose.msra.mxu0 0.0
    %257 = vmatpush.xpose.msra.mxu0 0.0
    %258 = vmatpush.xpose.msra.mxu0 0.0
    %259 = vmatpush.xpose.msra.mxu0 0.0
    %260 = vmatpush.xpose.msra.mxu0 0.0
    %261 = vmatpush.xpose.msra.mxu0 0.0
    %262 = vmatpush.xpose.msra.mxu0 0.0
    %263 = vmatpush.xpose.msra.mxu0 0.0
    %264 = vmatpush.xpose.msra.mxu0 0.0
    %265 = vmatpush.xpose.msra.mxu0 0.0
    %266 = vmatpush.xpose.msra.mxu0 0.0
    %267 = vmatpush.xpose.msra.mxu0 0.0
    %268 = vmatpush.xpose.msra.mxu0 0.0
    %269 = vmatpush.xpose.msra.mxu0 %v252
    %270 = vmatmul.f32.gmra.mxu0 %v249
    %v271 = vpop.f32.mrf.mxu0
    %v272 = vadd.f32 %v89, %v271
    %273 = vdwg.mxu0
    %v275 = vsel %vm91, %v66, 0
    %v278 = vsel %vm91, %v74, 0
    %280 = vmatpush.xpose.msra.mxu0 0.0
    %281 = vmatpush.xpose.msra.mxu0 0.0
    %282 = vmatpush.xpose.msra.mxu0 0.0
    %283 = vmatpush.xpose.msra.mxu0 0.0
    %284 = vmatpush.xpose.msra.mxu0 0.0
    %285 = vmatpush.xpose.msra.mxu0 0.0
    %286 = vmatpush.xpose.msra.mxu0 0.0
    %287 = vmatpush.xpose.msra.mxu0 0.0
    %288 = vmatpush.xpose.msra.mxu0 0.0
    %289 = vmatpush.xpose.msra.mxu0 0.0
    %290 = vmatpush.xpose.msra.mxu0 0.0
    %291 = vmatpush.xpose.msra.mxu0 0.0
    %292 = vmatpush.xpose.msra.mxu0 0.0
    %293 = vmatpush.xpose.msra.mxu0 0.0
    %294 = vmatpush.xpose.msra.mxu0 0.0
    %295 = vmatpush.xpose.msra.mxu0 %v278
    %296 = vmatmul.f32.gmra.mxu0 %v275
    %v297 = vpop.f32.mrf.mxu0
    %v298 = vadd.f32 %v90, %v297
    %299 = vdwg.mxu0
    %v300 = vsel %vm91, %v116, -inf
    %301 = vmax.xlane.f32.xlu0 %v300
    %v302 = vpop.xlane.xlu0 %301
    %v303 = vsel %vm91, %v142, -inf
    %304 = vmax.xlane.f32.xlu0 %v303
    %v305 = vpop.xlane.xlu0 %304
    %v306 = vsel %vm91, %v168, -inf
    %307 = vmax.xlane.f32.xlu0 %v306
    %v308 = vpop.xlane.xlu0 %307
    %v309 = vsel %vm91, %v194, -inf
    %310 = vmax.xlane.f32.xlu0 %v309
    %v311 = vpop.xlane.xlu0 %310
    %v312 = vsel %vm91, %v220, -inf
    %313 = vmax.xlane.f32.xlu0 %v312
    %v314 = vpop.xlane.xlu0 %313
    %v315 = vsel %vm91, %v246, -inf
    %316 = vmax.xlane.f32.xlu0 %v315
    %v317 = vpop.xlane.xlu0 %316
    %v318 = vsel %vm91, %v272, -inf
    %319 = vmax.xlane.f32.xlu0 %v318
    %v320 = vpop.xlane.xlu0 %319
    %v321 = vsel %vm91, %v298, -inf
    %322 = vmax.xlane.f32.xlu0 %v321
    %v323 = vpop.xlane.xlu0 %322
    %v324 = vsub.f32 %v116, %v302
    %v325 = vsub.f32 %v142, %v305
    %v326 = vsub.f32 %v168, %v308
    %v327 = vsub.f32 %v194, %v311
    %v328 = vsub.f32 %v220, %v314
    %v329 = vsub.f32 %v246, %v317
    %v330 = vsub.f32 %v272, %v320
    %v331 = vsub.f32 %v298, %v323
    %v332 = vmul.f32 %v324, 1.442695
    %v333 = vpow.pop %v332
    %v334 = vmul.f32 %v325, 1.442695
    %v335 = vpow.pop %v334
    %v336 = vmul.f32 %v326, 1.442695
    %v337 = vpow.pop %v336
    %v338 = vmul.f32 %v327, 1.442695
    %v339 = vpow.pop %v338
    %v340 = vmul.f32 %v328, 1.442695
    %v341 = vpow.pop %v340
    %v342 = vmul.f32 %v329, 1.442695
    %v343 = vpow.pop %v342
    %v344 = vmul.f32 %v330, 1.442695
    %v345 = vpow.pop %v344
    %v346 = vmul.f32 %v331, 1.442695
    %v347 = vpow.pop %v346
    %v348 = vsel %vm91, %v333, 0.0
    %349 = vadd.xlane.f32.xlu0 %v348
    %v350 = vpop.xlane.xlu0 %349
    %v351 = vsel %vm91, %v335, 0.0
    %352 = vadd.xlane.f32.xlu0 %v351
    %v353 = vpop.xlane.xlu0 %352
    %v354 = vsel %vm91, %v337, 0.0
    %355 = vadd.xlane.f32.xlu0 %v354
    %v356 = vpop.xlane.xlu0 %355
    %v357 = vsel %vm91, %v339, 0.0
    %358 = vadd.xlane.f32.xlu0 %v357
    %v359 = vpop.xlane.xlu0 %358
    %v360 = vsel %vm91, %v341, 0.0
    %361 = vadd.xlane.f32.xlu0 %v360
    %v362 = vpop.xlane.xlu0 %361
    %v363 = vsel %vm91, %v343, 0.0
    %364 = vadd.xlane.f32.xlu0 %v363
    %v365 = vpop.xlane.xlu0 %364
    %v366 = vsel %vm91, %v345, 0.0
    %367 = vadd.xlane.f32.xlu0 %v366
    %v368 = vpop.xlane.xlu0 %367
    %v369 = vsel %vm91, %v347, 0.0
    %370 = vadd.xlane.f32.xlu0 %v369
    %v371 = vpop.xlane.xlu0 %370
    %v372 = vrcp.pop %v350
    %v373 = vrcp.pop %v353
    %v374 = vrcp.pop %v356
    %v375 = vrcp.pop %v359
    %v376 = vrcp.pop %v362
    %v377 = vrcp.pop %v365
    %v378 = vrcp.pop %v368
    %v379 = vrcp.pop %v371
    %v380 = vmul.f32 %v333, %v372
    %v381 = vmul.f32 %v335, %v373
    %v382 = vmul.f32 %v337, %v374
    %v383 = vmul.f32 %v339, %v375
    %v384 = vmul.f32 %v341, %v376
    %v385 = vmul.f32 %v343, %v377
    %v386 = vmul.f32 %v345, %v378
    %v387 = vmul.f32 %v347, %v379
    %v389 = vsel %vm91, %v380, 0
    %391 = vmatpush.msra.mxu0 0.0
    %392 = vmatpush.msra.mxu0 0.0
    %393 = vmatpush.msra.mxu0 0.0
    %394 = vmatpush.msra.mxu0 0.0
    %395 = vmatpush.msra.mxu0 0.0
    %396 = vmatpush.msra.mxu0 0.0
    %397 = vmatpush.msra.mxu0 0.0
    %398 = vmatpush.msra.mxu0 0.0
    %399 = vmatpush.msra.mxu0 0.0
    %400 = vmatpush.msra.mxu0 0.0
    %401 = vmatpush.msra.mxu0 0.0
    %402 = vmatpush.msra.mxu0 0.0
    %403 = vmatpush.msra.mxu0 0.0
    %404 = vmatpush.msra.mxu0 0.0
    %405 = vmatpush.msra.mxu0 0.0
    %406 = vmatpush.msra.mxu0 %v75
    %407 = vmatmul.f32.gmra.mxu0 %v389
    %v408 = vpop.f32.mrf.mxu0
    %v409 = vadd.f32 0.0, %v408
    %410 = vdwg.mxu0
    %v412 = vsel %vm91, %v381, 0
    %414 = vmatpush.msra.mxu0 0.0
    %415 = vmatpush.msra.mxu0 0.0
    %416 = vmatpush.msra.mxu0 0.0
    %417 = vmatpush.msra.mxu0 0.0
    %418 = vmatpush.msra.mxu0 0.0
    %419 = vmatpush.msra.mxu0 0.0
    %420 = vmatpush.msra.mxu0 0.0
    %421 = vmatpush.msra.mxu0 0.0
    %422 = vmatpush.msra.mxu0 0.0
    %423 = vmatpush.msra.mxu0 0.0
    %424 = vmatpush.msra.mxu0 0.0
    %425 = vmatpush.msra.mxu0 0.0
    %426 = vmatpush.msra.mxu0 0.0
    %427 = vmatpush.msra.mxu0 0.0
    %428 = vmatpush.msra.mxu0 0.0
    %429 = vmatpush.msra.mxu0 %v76
    %430 = vmatmul.f32.gmra.mxu0 %v412
    %v431 = vpop.f32.mrf.mxu0
    %v432 = vadd.f32 0.0, %v431
    %433 = vdwg.mxu0
    %v435 = vsel %vm91, %v382, 0
    %437 = vmatpush.msra.mxu0 0.0
    %438 = vmatpush.msra.mxu0 0.0
    %439 = vmatpush.msra.mxu0 0.0
    %440 = vmatpush.msra.mxu0 0.0
    %441 = vmatpush.msra.mxu0 0.0
    %442 = vmatpush.msra.mxu0 0.0
    %443 = vmatpush.msra.mxu0 0.0
    %444 = vmatpush.msra.mxu0 0.0
    %445 = vmatpush.msra.mxu0 0.0
    %446 = vmatpush.msra.mxu0 0.0
    %447 = vmatpush.msra.mxu0 0.0
    %448 = vmatpush.msra.mxu0 0.0
    %449 = vmatpush.msra.mxu0 0.0
    %450 = vmatpush.msra.mxu0 0.0
    %451 = vmatpush.msra.mxu0 0.0
    %452 = vmatpush.msra.mxu0 %v77
    %453 = vmatmul.f32.gmra.mxu0 %v435
    %v454 = vpop.f32.mrf.mxu0
    %v455 = vadd.f32 0.0, %v454
    %456 = vdwg.mxu0
    %v458 = vsel %vm91, %v383, 0
    %460 = vmatpush.msra.mxu0 0.0
    %461 = vmatpush.msra.mxu0 0.0
    %462 = vmatpush.msra.mxu0 0.0
    %463 = vmatpush.msra.mxu0 0.0
    %464 = vmatpush.msra.mxu0 0.0
    %465 = vmatpush.msra.mxu0 0.0
    %466 = vmatpush.msra.mxu0 0.0
    %467 = vmatpush.msra.mxu0 0.0
    %468 = vmatpush.msra.mxu0 0.0
    %469 = vmatpush.msra.mxu0 0.0
    %470 = vmatpush.msra.mxu0 0.0
    %471 = vmatpush.msra.mxu0 0.0
    %472 = vmatpush.msra.mxu0 0.0
    %473 = vmatpush.msra.mxu0 0.0
    %474 = vmatpush.msra.mxu0 0.0
    %475 = vmatpush.msra.mxu0 %v78
    %476 = vmatmul.f32.gmra.mxu0 %v458
    %v477 = vpop.f32.mrf.mxu0
    %v478 = vadd.f32 0.0, %v477
    %479 = vdwg.mxu0
    %v481 = vsel %vm91, %v384, 0
    %483 = vmatpush.msra.mxu0 0.0
    %484 = vmatpush.msra.mxu0 0.0
    %485 = vmatpush.msra.mxu0 0.0
    %486 = vmatpush.msra.mxu0 0.0
    %487 = vmatpush.msra.mxu0 0.0
    %488 = vmatpush.msra.mxu0 0.0
    %489 = vmatpush.msra.mxu0 0.0
    %490 = vmatpush.msra.mxu0 0.0
    %491 = vmatpush.msra.mxu0 0.0
    %492 = vmatpush.msra.mxu0 0.0
    %493 = vmatpush.msra.mxu0 0.0
    %494 = vmatpush.msra.mxu0 0.0
    %495 = vmatpush.msra.mxu0 0.0
    %496 = vmatpush.msra.mxu0 0.0
    %497 = vmatpush.msra.mxu0 0.0
    %498 = vmatpush.msra.mxu0 %v79
    %499 = vmatmul.f32.gmra.mxu0 %v481
    %v500 = vpop.f32.mrf.mxu0
    %v501 = vadd.f32 0.0, %v500
    %502 = vdwg.mxu0
    %v504 = vsel %vm91, %v385, 0
    %506 = vmatpush.msra.mxu0 0.0
    %507 = vmatpush.msra.mxu0 0.0
    %508 = vmatpush.msra.mxu0 0.0
    %509 = vmatpush.msra.mxu0 0.0
    %510 = vmatpush.msra.mxu0 0.0
    %511 = vmatpush.msra.mxu0 0.0
    %512 = vmatpush.msra.mxu0 0.0
    %513 = vmatpush.msra.mxu0 0.0
    %514 = vmatpush.msra.mxu0 0.0
    %515 = vmatpush.msra.mxu0 0.0
    %516 = vmatpush.msra.mxu0 0.0
    %517 = vmatpush.msra.mxu0 0.0
    %518 = vmatpush.msra.mxu0 0.0
    %519 = vmatpush.msra.mxu0 0.0
    %520 = vmatpush.msra.mxu0 0.0
    %521 = vmatpush.msra.mxu0 %v80
    %522 = vmatmul.f32.gmra.mxu0 %v504
    %v523 = vpop.f32.mrf.mxu0
    %v524 = vadd.f32 0.0, %v523
    %525 = vdwg.mxu0
    %v527 = vsel %vm91, %v386, 0
    %529 = vmatpush.msra.mxu0 0.0
    %530 = vmatpush.msra.mxu0 0.0
    %531 = vmatpush.msra.mxu0 0.0
    %532 = vmatpush.msra.mxu0 0.0
    %533 = vmatpush.msra.mxu0 0.0
    %534 = vmatpush.msra.mxu0 0.0
    %535 = vmatpush.msra.mxu0 0.0
    %536 = vmatpush.msra.mxu0 0.0
    %537 = vmatpush.msra.mxu0 0.0
    %538 = vmatpush.msra.mxu0 0.0
    %539 = vmatpush.msra.mxu0 0.0
    %540 = vmatpush.msra.mxu0 0.0
    %541 = vmatpush.msra.mxu0 0.0
    %542 = vmatpush.msra.mxu0 0.0
    %543 = vmatpush.msra.mxu0 0.0
    %544 = vmatpush.msra.mxu0 %v81
    %545 = vmatmul.f32.gmra.mxu0 %v527
    %v546 = vpop.f32.mrf.mxu0
    %v547 = vadd.f32 0.0, %v546
    %548 = vdwg.mxu0
    %v550 = vsel %vm91, %v387, 0
    %552 = vmatpush.msra.mxu0 0.0
    %553 = vmatpush.msra.mxu0 0.0
    %554 = vmatpush.msra.mxu0 0.0
    %555 = vmatpush.msra.mxu0 0.0
    %556 = vmatpush.msra.mxu0 0.0
    %557 = vmatpush.msra.mxu0 0.0
    %558 = vmatpush.msra.mxu0 0.0
    %559 = vmatpush.msra.mxu0 0.0
    %560 = vmatpush.msra.mxu0 0.0
    %561 = vmatpush.msra.mxu0 0.0
    %562 = vmatpush.msra.mxu0 0.0
    %563 = vmatpush.msra.mxu0 0.0
    %564 = vmatpush.msra.mxu0 0.0
    %565 = vmatpush.msra.mxu0 0.0
    %566 = vmatpush.msra.mxu0 0.0
    %567 = vmatpush.msra.mxu0 %v82
    %568 = vmatmul.f32.gmra.mxu0 %v550
    %v569 = vpop.f32.mrf.mxu0
    %v570 = vadd.f32 0.0, %v569
    %571 = vdwg.mxu0
    %572 = vst.msk [vmem:[#allocation2] sm:$0xff] %vm91, %v409
    %574 = vrot.lane.b32.xlu0 %v432, 8
    %v575 = vpop.permute.xlu0 %574
    %vm577 = vcmask 130112
    %578 = vst.msk [vmem:[#allocation2] sm:$0xff] %vm577, %v575
    %580 = vrot.lane.b32.xlu0 %v455, 16
    %v581 = vpop.permute.xlu0 %580
    %vm583 = vcmask 195712
    %584 = vst.msk [vmem:[#allocation2] sm:$0xff] %vm583, %v581
    %586 = vrot.lane.b32.xlu0 %v478, 24
    %v587 = vpop.permute.xlu0 %586
    %vm589 = vcmask 261312
    %590 = vst.msk [vmem:[#allocation2] sm:$0xff] %vm589, %v587
    %591 = vst.msk [vmem:[#allocation2 + $0x8] sm:$0xff] %vm91, %v501
    %593 = vrot.lane.b32.xlu0 %v524, 8
    %v594 = vpop.permute.xlu0 %593
    %596 = vst.msk [vmem:[#allocation2 + $0x8] sm:$0xff] %vm577, %v594
    %598 = vrot.lane.b32.xlu0 %v547, 16
    %v599 = vpop.permute.xlu0 %598
    %601 = vst.msk [vmem:[#allocation2 + $0x8] sm:$0xff] %vm583, %v599
    %603 = vrot.lane.b32.xlu0 %v570, 24
    %v604 = vpop.permute.xlu0 %603
    %606 = vst.msk [vmem:[#allocation2 + $0x8] sm:$0xff] %vm589, %v604
    %v607 = vld [vmem:[#allocation2] sm:$0xff]
    %v608 = vld [vmem:[#allocation2 + $0x8] sm:$0xff]
    %v609 = vld [vmem:[%s5] sm:$0xff]
    %v610 = vld [vmem:[%s5 + $0x8] sm:$0xff]
    %v611 = vld [vmem:[%s5 + $0x10] sm:$0xff]
    %v612 = vld [vmem:[%s5 + $0x18] sm:$0xff]
    %v613 = vld [vmem:[%s6] sm:$0x1]
    %v615 = vperm.slane %v613, 0
    %vm617 = vcmask 261120
    %v619 = vsel %vm617, %v607, 0
    %v622 = vsel %vm617, %v608, 0
    %624 = vmatpush.msra.mxu0 0.0
    %625 = vmatpush.msra.mxu0 0.0
    %626 = vmatpush.msra.mxu0 0.0
    %627 = vmatpush.msra.mxu0 0.0
    %628 = vmatpush.msra.mxu0 0.0
    %629 = vmatpush.msra.mxu0 0.0
    %630 = vmatpush.msra.mxu0 0.0
    %631 = vmatpush.msra.mxu0 0.0
    %632 = vmatpush.msra.mxu0 0.0
    %633 = vmatpush.msra.mxu0 0.0
    %634 = vmatpush.msra.mxu0 0.0
    %635 = vmatpush.msra.mxu0 0.0
    %636 = vmatpush.msra.mxu0 %v612
    %637 = vmatpush.msra.mxu0 %v611
    %638 = vmatpush.msra.mxu0 %v610
    %639 = vmatpush.msra.mxu0 %v609
    %640 = vmatmul.f32.gmra.mxu0 %v619
    %v641 = vpop.f32.mrf.mxu0
    %v642 = vadd.f32 %v615, %v641
    %643 = vmatmul.f32.gmra.mxu0 %v622
    %v644 = vpop.f32.mrf.mxu0
    %v645 = vadd.f32 %v615, %v644
    %646 = vdwg.mxu0
    %v647 = vld [vmem:[%s4] sm:$0xff]
    %v648 = vld [vmem:[%s4 + $0x8] sm:$0xff]
    %v649 = vadd.f32 %v642, %v647
    %v650 = vadd.f32 %v645, %v648
    %v651 = vsel %vm617, %v649, 0.0
    %652 = vadd.xlane.f32.xlu0 %v651
    %v653 = vpop.xlane.xlu0 %652
    %v654 = vsel %vm617, %v650, 0.0
    %655 = vadd.xlane.f32.xlu0 %v654
    %v656 = vpop.xlane.xlu0 %655
    %v657 = vrcp.pop 32.0
    %v658 = vmul.f32 32.0, %v657
    %v659 = vsub.f32 1.0, %v658
    %v660 = vmul.f32 %v657, %v659
    %v661 = vadd.f32 %v657, %v660
    %vm662 = vweird.f32 %v657
    %v663 = vsel %vm662, %v657, %v661
    %v664 = vmul.f32 %v653, %v663
    %v665 = vmul.f32 %v656, %v663
    %v666 = vsub.f32 %v649, %v664
    %v667 = vsub.f32 %v650, %v665
    %v668 = vmul.f32 %v666, %v666
    %v669 = vmul.f32 %v667, %v667
    %v670 = vsel %vm617, %v668, 0.0
    %671 = vadd.xlane.f32.xlu0 %v670
    %v672 = vpop.xlane.xlu0 %671
    %v673 = vsel %vm617, %v669, 0.0
    %674 = vadd.xlane.f32.xlu0 %v673
    %v675 = vpop.xlane.xlu0 %674
    %v676 = vmul.f32 %v672, %v663
    %v677 = vmul.f32 %v675, %v663
    %v678 = vadd.f32 %v676, 1e-05
    %v679 = vadd.f32 %v677, 1e-05
    %v680 = vrsqrt.pop %v678
    %v681 = vmul.f32 %v680, %v678
    %v682 = vmul.f32 %v681, %v680
    %v683 = vmul.f32 0.5, %v682
    %v684 = vsub.f32 1.5, %v683
    %v685 = vmul.f32 %v680, %v684
    %vm686 = vweird.f32 %v678
    %vm687 = vweird.f32 %v680
    %vm688 = vmor %vm686, %vm687
    %v689 = vsel %vm688, %v680, %v685
    %v690 = vrsqrt.pop %v679
    %v691 = vmul.f32 %v690, %v679
    %v692 = vmul.f32 %v691, %v690
    %v693 = vmul.f32 0.5, %v692
    %v694 = vsub.f32 1.5, %v693
    %v695 = vmul.f32 %v690, %v694
    %vm696 = vweird.f32 %v679
    %vm697 = vweird.f32 %v690
    %vm698 = vmor %vm696, %vm697
    %v699 = vsel %vm698, %v690, %v695
    %v700 = vmul.f32 %v666, %v689
    %v701 = vmul.f32 %v667, %v699
    %v702 = vld [vmem:[%s7] sm:$0x1]
    %v704 = vperm.slane %v702, 0
    %v706 = vmul.f32 %v700, %v704
    %v707 = vmul.f32 %v701, %v704
    %v708 = vld [vmem:[%s8] sm:$0x1]
    %v710 = vperm.slane %v708, 0
    %v712 = vadd.f32 %v706, %v710
    %v713 = vadd.f32 %v707, %v710
    %v714 = vld [vmem:[%s9] sm:$0xff]
    %v715 = vld [vmem:[%s9 + $0x8] sm:$0xff]
    %v716 = vld [vmem:[%s9 + $0x10] sm:$0xff]
    %v717 = vld [vmem:[%s9 + $0x18] sm:$0xff]
    %v718 = vld [vmem:[%s10] sm:$0x1]
    %v720 = vperm.slane %v718, 0
    %v723 = vsel %vm617, %v712, 0
    %v726 = vsel %vm617, %v713, 0
    %728 = vmatpush.msra.mxu0 0.0
    %729 = vmatpush.msra.mxu0 0.0
    %730 = vmatpush.msra.mxu0 0.0
    %731 = vmatpush.msra.mxu0 0.0
    %732 = vmatpush.msra.mxu0 0.0
    %733 = vmatpush.msra.mxu0 0.0
    %734 = vmatpush.msra.mxu0 0.0
    %735 = vmatpush.msra.mxu0 0.0
    %736 = vmatpush.msra.mxu0 0.0
    %737 = vmatpush.msra.mxu0 0.0
    %738 = vmatpush.msra.mxu0 0.0
    %739 = vmatpush.msra.mxu0 0.0
    %740 = vmatpush.msra.mxu0 %v717
    %741 = vmatpush.msra.mxu0 %v716
    %742 = vmatpush.msra.mxu0 %v715
    %743 = vmatpush.msra.mxu0 %v714
    %744 = vmatmul.f32.gmra.mxu0 %v723
    %v745 = vpop.f32.mrf.mxu0
    %v746 = vadd.f32 %v720, %v745
    %747 = vmatmul.f32.gmra.mxu0 %v726
    %v748 = vpop.f32.mrf.mxu0
    %v749 = vadd.f32 %v720, %v748
    %750 = vdwg.mxu0
    %v751 = vmul.f32 %v746, 0.5
    %v752 = vmul.f32 %v749, 0.5
    %v753 = vmul.f32 %v746, 0.70710677
    %v754 = vmul.f32 %v749, 0.70710677
    %v755 = vmul.f32 %v753, %v753
    %v756 = vmin.f32 16.0, %v755
    %v757 = vmul.f32 %v756, 2.1237322e-06
    %v758 = vadd.f32 %v757, 0.00028619796
    %v759 = vmul.f32 %v756, %v758
    %v760 = vadd.f32 %v759, 0.0036580483
    %v761 = vmul.f32 %v756, %v760
    %v762 = vadd.f32 %v761, 0.05243302
    %v763 = vmul.f32 %v756, %v762
    %v764 = vadd.f32 %v763, 0.18741608
    %v765 = vmul.f32 %v756, %v764
    %v766 = vadd.f32 %v765, 1.1283791
    %v767 = vmul.f32 %v753, %v766
    %v768 = vmul.f32 %v756, 3.8918573e-05
    %v769 = vadd.f32 %v768, 0.001143296
    %v770 = vmul.f32 %v756, %v769
    %v771 = vadd.f32 %v770, 0.014752088
    %v772 = vmul.f32 %v756, %v771
    %v773 = vadd.f32 %v772, 0.112945676
    %v774 = vmul.f32 %v756, %v773
    %v775 = vadd.f32 %v774, 0.4994258
    %v776 = vmul.f32 %v756, %v775
    %v777 = vadd.f32 %v776, 1.0
    %v778 = vrcp.pop %v777
    %v779 = vmul.f32 %v777, %v778
    %v780 = vsub.f32 1.0, %v779
    %v781 = vmul.f32 %v778, %v780
    %v782 = vadd.f32 %v778, %v781
    %vm783 = vweird.f32 %v777
    %vm784 = vweird.f32 %v778
    %vm785 = vmor %vm783, %vm784
    %v786 = vsel %vm785, %v778, %v782
    %v787 = vand.u32 2147483647, %v777
    %vm788 = vcmp.eq.f32.partialorder %v787, 8.507059e+37
    %v789 = vand.u32 %v777, 2147483648
    %v790 = vor.u32 1.1754944e-38, %v789
    %v791 = vsel %vm788, %v790, %v786
    %v792 = vmul.f32 %v767, %v791
    %v793 = vmin.f32 %v792, 1.0
    %v794 = vmax.f32 %v793, -1.0
    %v795 = vmul.f32 %v754, %v754
    %v796 = vmin.f32 16.0, %v795
    %v797 = vmul.f32 %v796, 2.1237322e-06
    %v798 = vadd.f32 %v797, 0.00028619796
    %v799 = vmul.f32 %v796, %v798
    %v800 = vadd.f32 %v799, 0.0036580483
    %v801 = vmul.f32 %v796, %v800
    %v802 = vadd.f32 %v801, 0.05243302
    %v803 = vmul.f32 %v796, %v802
    %v804 = vadd.f32 %v803, 0.18741608
    %v805 = vmul.f32 %v796, %v804
    %v806 = vadd.f32 %v805, 1.1283791
    %v807 = vmul.f32 %v754, %v806
    %v808 = vmul.f32 %v796, 3.8918573e-05
    %v809 = vadd.f32 %v808, 0.001143296
    %v810 = vmul.f32 %v796, %v809
    %v811 = vadd.f32 %v810, 0.014752088
    %v812 = vmul.f32 %v796, %v811
    %v813 = vadd.f32 %v812, 0.112945676
    %v814 = vmul.f32 %v796, %v813
    %v815 = vadd.f32 %v814, 0.4994258
    %v816 = vmul.f32 %v796, %v815
    %v817 = vadd.f32 %v816, 1.0
    %v818 = vrcp.pop %v817
    %v819 = vmul.f32 %v817, %v818
    %v820 = vsub.f32 1.0, %v819
    %v821 = vmul.f32 %v818, %v820
    %v822 = vadd.f32 %v818, %v821
    %vm823 = vweird.f32 %v817
    %vm824 = vweird.f32 %v818
    %vm825 = vmor %vm823, %vm824
    %v826 = vsel %vm825, %v818, %v822
    %v827 = vand.u32 2147483647, %v817
    %vm828 = vcmp.eq.f32.partialorder %v827, 8.507059e+37
    %v829 = vand.u32 %v817, 2147483648
    %v830 = vor.u32 1.1754944e-38, %v829
    %v831 = vsel %vm828, %v830, %v826
    %v832 = vmul.f32 %v807, %v831
    %v833 = vmin.f32 %v832, 1.0
    %v834 = vmax.f32 %v833, -1.0
    %v835 = vadd.f32 %v794, 1.0
    %v836 = vadd.f32 %v834, 1.0
    %v837 = vmul.f32 %v751, %v835
    %v838 = vmul.f32 %v752, %v836
    %v839 = vld [vmem:[%s11] sm:$0xff]
    %v840 = vld [vmem:[%s11 + $0x8] sm:$0xff]
    %v841 = vld [vmem:[%s11 + $0x10] sm:$0xff]
    %v842 = vld [vmem:[%s11 + $0x18] sm:$0xff]
    %v843 = vld [vmem:[%s11 + $0x20] sm:$0xff]
    %v844 = vld [vmem:[%s11 + $0x28] sm:$0xff]
    %v845 = vld [vmem:[%s11 + $0x30] sm:$0xff]
    %v846 = vld [vmem:[%s11 + $0x38] sm:$0xff]
    %v847 = vld [vmem:[%s11 + $0x40] sm:$0xff]
    %v848 = vld [vmem:[%s11 + $0x48] sm:$0xff]
    %v849 = vld [vmem:[%s11 + $0x50] sm:$0xff]
    %v850 = vld [vmem:[%s11 + $0x58] sm:$0xff]
    %v851 = vld [vmem:[%s11 + $0x60] sm:$0xff]
    %v852 = vld [vmem:[%s11 + $0x68] sm:$0xff]
    %v853 = vld [vmem:[%s11 + $0x70] sm:$0xff]
    %v854 = vld [vmem:[%s11 + $0x78] sm:$0xff]
    %v855 = vld [vmem:[%s12] sm:$0x1]
    %v857 = vperm.slane %v855, 0
    %859 = vmatpush.msra.mxu0 %v854
    %860 = vmatpush.msra.mxu0 %v853
    %861 = vmatpush.msra.mxu0 %v852
    %862 = vmatpush.msra.mxu0 %v851
    %863 = vmatpush.msra.mxu0 %v850
    %864 = vmatpush.msra.mxu0 %v849
    %865 = vmatpush.msra.mxu0 %v848
    %866 = vmatpush.msra.mxu0 %v847
    %867 = vmatpush.msra.mxu0 %v846
    %868 = vmatpush.msra.mxu0 %v845
    %869 = vmatpush.msra.mxu0 %v844
    %870 = vmatpush.msra.mxu0 %v843
    %871 = vmatpush.msra.mxu0 %v842
    %872 = vmatpush.msra.mxu0 %v841
    %873 = vmatpush.msra.mxu0 %v840
    %874 = vmatpush.msra.mxu0 %v839
    %875 = vmatmul.f32.gmra.mxu0 %v837
    %v876 = vpop.f32.mrf.mxu0
    %v877 = vadd.f32 %v857, %v876
    %878 = vmatmul.f32.gmra.mxu0 %v838
    %v879 = vpop.f32.mrf.mxu0
    %v880 = vadd.f32 %v857, %v879
    %881 = vdwg.mxu0
    %v882 = vadd.f32 %v877, %v712
    %v883 = vadd.f32 %v880, %v713
    %v884 = vsel %vm617, %v882, 0.0
    %885 = vadd.xlane.f32.xlu0 %v884
    %v886 = vpop.xlane.xlu0 %885
    %v887 = vsel %vm617, %v883, 0.0
    %888 = vadd.xlane.f32.xlu0 %v887
    %v889 = vpop.xlane.xlu0 %888
    %v890 = vmul.f32 %v886, %v663
    %v891 = vmul.f32 %v889, %v663
    %v892 = vsub.f32 %v882, %v890
    %v893 = vsub.f32 %v883, %v891
    %v894 = vmul.f32 %v892, %v892
    %v895 = vmul.f32 %v893, %v893
    %v896 = vsel %vm617, %v894, 0.0
    %897 = vadd.xlane.f32.xlu0 %v896
    %v898 = vpop.xlane.xlu0 %897
    %v899 = vsel %vm617, %v895, 0.0
    %900 = vadd.xlane.f32.xlu0 %v899
    %v901 = vpop.xlane.xlu0 %900
    %v902 = vmul.f32 %v898, %v663
    %v903 = vmul.f32 %v901, %v663
    %v904 = vadd.f32 %v902, 1e-05
    %v905 = vadd.f32 %v903, 1e-05
    %v906 = vrsqrt.pop %v904
    %v907 = vmul.f32 %v906, %v904
    %v908 = vmul.f32 %v907, %v906
    %v909 = vmul.f32 0.5, %v908
    %v910 = vsub.f32 1.5, %v909
    %v911 = vmul.f32 %v906, %v910
    %vm912 = vweird.f32 %v904
    %vm913 = vweird.f32 %v906
    %vm914 = vmor %vm912, %vm913
    %v915 = vsel %vm914, %v906, %v911
    %v916 = vrsqrt.pop %v905
    %v917 = vmul.f32 %v916, %v905
    %v918 = vmul.f32 %v917, %v916
    %v919 = vmul.f32 0.5, %v918
    %v920 = vsub.f32 1.5, %v919
    %v921 = vmul.f32 %v916, %v920
    %vm922 = vweird.f32 %v905
    %vm923 = vweird.f32 %v916
    %vm924 = vmor %vm922, %vm923
    %v925 = vsel %vm924, %v916, %v921
    %v926 = vmul.f32 %v892, %v915
    %v927 = vmul.f32 %v893, %v925
    %v928 = vld [vmem:[%s13] sm:$0x1]
    %v930 = vperm.slane %v928, 0
    %v932 = vmul.f32 %v926, %v930
    %v933 = vmul.f32 %v927, %v930
    %v934 = vld [vmem:[%s14] sm:$0x1]
    %v936 = vperm.slane %v934, 0
    %v938 = vadd.f32 %v932, %v936
    %v939 = vadd.f32 %v933, %v936
    %940 = vst.msk [vmem:[#allocation3] sm:$0xff] %vm617, %v938
    %941 = vst.msk [vmem:[#allocation3 + $0x8] sm:$0xff] %vm617, %v939
    // Predicated region
    $region62: #{transformer_block.1} parent=1 // pred_check
      _
    $region63: #{transformer_block.1} parent=1 // pred_check_branch
      %943 = sbr.rel (0) target = $region65
    $region64: #{transformer_block.1} parent=1 // pred_region
      %945 = vsyncadd [#allocation4], 0
      %s946 = sshll.u32 [#allocation3], 4
      %s947 = int_to_ptr.vmem [resolvable:$true] %s946
      %s948 = sshll.u32 %s15, 4
      %s949 = int_to_ptr.hbm [resolvable:$true] %s948
      %954 = dma.vmem_to_hbm [thread:$0]  %s947, 256, %s949, [#allocation4], 128, 128, 8
    $region65: #{transformer_block.1} parent=1 // pred_fallthru
      _
    // Predicated region
    $region66: #{transformer_block.1} parent=1 // pred_check
      _
    $region67: #{transformer_block.1} parent=1 // pred_check_branch
      %956 = sbr.rel (0) target = $region69
    $region68: #{transformer_block.1} parent=1 // pred_region
      %958 = dma.done [#allocation4], 256
    $region69: #{transformer_block.1} parent=1 // pred_fallthru
      _
    %959 = vsyncpa [#allocation4], 1

</llo_original>
